<compile_context>
chip_gen: v5e
topology: v5e:2x2
jax: 0.10.0
libtpu: 0.0.40
codegen_flags: <defaults>
</compile_context>

<pallas_src>
import jax
import jax.numpy as jnp
from jax import lax
from jax.experimental import pallas as pl
from jax.experimental.pallas import tpu as pltpu


def _round_up(x, m):
    return ((x + m - 1) // m) * m


def fc_binary_kernel(x_ref, w_ref, b_ref, o_ref):
    # x_ref: (TB, D)   w_ref: (2, D)   b_ref: (1, 2)   o_ref: (TB, 2)
    # Contract x's dim 1 with w's dim 1 (i.e. x @ w.T) directly on the MXU,
    # keeping the weight in its lane-dense (2, D) layout.
    acc = lax.dot_general(
        x_ref[...], w_ref[...],
        dimension_numbers=(((1,), (1,)), ((), ())),
        preferred_element_type=jnp.float32,
    )
    o_ref[...] = (acc + b_ref[...].astype(jnp.float32)).astype(o_ref.dtype)


def _choose_batch_tile(B, D, x_itemsize, out_itemsize, budget_bytes):
    """Pick the batch tile so the whole double-buffered working set fits budget."""
    # Per batch row, per pipeline stage:
    #   x tile:   D * x_itemsize          (2 buffers)
    #   out tile: padded to 128 lanes ->  128 * out_itemsize (2 buffers)
    per_row = 2 * (D * x_itemsize + 128 * out_itemsize)
    # Weight (2, D) is sublane-padded to (8, D); single buffer (Buffered(1)).
    weight_bytes = 8 * D * x_itemsize
    avail = max(budget_bytes - weight_bytes, per_row * 8)
    tb = (avail // per_row) // 8 * 8
    tb = max(8, tb)
    tb = min(tb, _round_up(B, 8))   # no point in tiles larger than the batch
    return int(tb)


def fc_layer_binary(x, weight, bias, *,
                    vmem_budget_bytes=32 * 1024 * 1024,
                    xla_fastpath_bytes=256 * 1024):
    """nn.Linear(input_size, 2) forward: x @ weight.T + bias.

    x:      (B, D)  batch-first, like PyTorch
    weight: (2, D)  native PyTorch layout (kept as-is, no transpose)
    bias:   (2,)
    """
    B, D = x.shape
    x_itemsize = jnp.dtype(x.dtype).itemsize
    out_dtype = x.dtype
    out_itemsize = jnp.dtype(out_dtype).itemsize

    # Tiny-problem fast path: kernel launch + pipeline prologue/epilogue
    # (a few us) dwarf the actual work; plain XLA is strictly faster.
    if B * D * x_itemsize < xla_fastpath_bytes:
        return jnp.dot(x, weight.T) + bias

    tb = _choose_batch_tile(B, D, x_itemsize, out_itemsize, vmem_budget_bytes)
    grid = (pl.cdiv(B, tb),)   # ragged tail block is clipped/masked by Pallas

    b2d = bias.reshape(1, 2)   # keep 2-D for TPU layout

    # TODO(synk): for very large D (>= ~64K) add a K-tiling "arbitrary" grid
    # axis with an f32 VMEM accumulator; not needed for typical FC input sizes.
    # TODO(synk): on v7x, sweep pl.Buffered(3) on the x spec and CORE_PARALLEL
    # semantics if profiling shows a TensorCore idle.
    out = pl.pallas_call(
        fc_binary_kernel,
        out_shape=jax.ShapeDtypeStruct((B, 2), out_dtype),
        grid_spec=pltpu.PrefetchScalarGridSpec(
            num_scalar_prefetch=0,
            grid=grid,
            in_specs=[
                # x: one TB-row tile per grid step (auto double-buffered DMA).
                pl.BlockSpec((tb, D), lambda i: (i, 0)),
                # weight / bias: constant block index -> fetched once and kept
                # VMEM-resident; single-buffered since they never change.
                pl.BlockSpec((2, D), lambda i: (0, 0),
                             pipeline_mode=pl.Buffered(1)),
                pl.BlockSpec((1, 2), lambda i: (0, 0),
                             pipeline_mode=pl.Buffered(1)),
            ],
            out_specs=pl.BlockSpec((tb, 2), lambda i: (i, 0)),
        ),
        compiler_params=pltpu.CompilerParams(
            # Independent batch blocks: lets v7x shard the grid across its
            # 2 TensorCores; harmless no-op on single-TC v5e/v6e.
            dimension_semantics=("parallel",),
            # Raise the scoped-VMEM limit (v5e default is only 16 MiB) but
            # stay under v7x's 64 MiB/TC physical VMEM.
            vmem_limit_bytes=48 * 1024 * 1024,
        ),
        cost_estimate=pl.CostEstimate(
            flops=4 * B * D,                                     # (B,D)@(D,2)
            bytes_accessed=x_itemsize * (B * D + 2 * D)
                           + out_itemsize * 2 * B
                           + 2 * x_itemsize,
            transcendentals=0,
        ),
    )(x, weight, b2d)

    return out


if __name__ == "__main__":
    key = jax.random.PRNGKey(0)
    k_x1, k_x2, k_w1, k_b1, k_w2, k_b2 = jax.random.split(key, 6)

    def make_params(input_size, kw, kb):
        # Deterministic "init" mimicking nn.Linear's uniform(-1/sqrt(D), 1/sqrt(D)).
        bound = 1.0 / (input_size ** 0.5)
        w = jax.random.uniform(kw, (2, input_size), jnp.float32, -bound, bound)
        b = jax.random.uniform(kb, (2,), jnp.float32, -bound, bound)
        return w, b

    # Case 1: tiny problem (module's typical test shape) -> XLA fast path.
    x1 = jax.random.normal(k_x1, (2, 32), dtype=jnp.float32)
    w1, b1 = make_params(32, k_w1, k_b1)
    o1 = jax.block_until_ready(fc_layer_binary(x1, w1, b1))
    ref1 = x1 @ w1.T + b1
    assert o1.shape == (2, 2)
    assert jnp.allclose(o1, ref1, atol=1e-3, rtol=1e-3)

    # Case 2: Pallas path, single batch block, ragged batch (B=250 not % 8).
    x2 = jax.random.normal(k_x2, (250, 512), dtype=jnp.float32)
    w2, b2 = make_params(512, k_w2, k_b2)
    o2 = jax.block_until_ready(fc_layer_binary(x2, w2, b2))
    ref2 = x2 @ w2.T + b2
    assert o2.shape == (250, 2)
    assert jnp.allclose(o2, ref2, atol=1e-3, rtol=1e-3)

    # Case 3: Pallas path with a small VMEM budget -> multi-block grid with a
    # clipped ragged tail block (exercises the no-padding tail handling).
    o3 = jax.block_until_ready(
        fc_layer_binary(x2, w2, b2, vmem_budget_bytes=384 * 1024))
    assert o3.shape == (250, 2)
    assert jnp.allclose(o3, ref2, atol=1e-3, rtol=1e-3)

    print("KERNEL_OK")
</pallas_src>

<mosaic_0001>
module attributes {stable_mosaic.version = 11 : i64} {
  func.func @fc_binary_kernel(%arg0: i32, %arg1: memref<256x512xf32, #tpu.memory_space<vmem>>, %arg2: memref<2x512xf32, #tpu.memory_space<vmem>>, %arg3: memref<1x2xf32, #tpu.memory_space<vmem>>, %arg4: memref<256x2xf32, #tpu.memory_space<vmem>>) attributes {dimension_semantics = [#tpu.dimension_semantics<parallel>], iteration_bounds = array<i64: 1>, scalar_prefetch = 0 : i64, scratch_operands = 0 : i64, tpu.core_type = #tpu.core_type<tc>, window_params = [{transform_indices = @transform_0, window_bounds = array<i64: 256, 512>}, {pipeline_mode = #tpu.pipeline_mode<synchronous>, transform_indices = @transform_1, window_bounds = array<i64: 2, 512>}, {pipeline_mode = #tpu.pipeline_mode<synchronous>, transform_indices = @transform_2, window_bounds = array<i64: 1, 2>}, {transform_indices = @transform_3, window_bounds = array<i64: 256, 2>}]} {
    %c0 = arith.constant 0 : index
    %c0_0 = arith.constant 0 : index
    %0 = vector.load %arg1[%c0, %c0_0] : memref<256x512xf32, #tpu.memory_space<vmem>>, vector<256x512xf32>
    %c0_1 = arith.constant 0 : index
    %c0_2 = arith.constant 0 : index
    %1 = vector.load %arg2[%c0_1, %c0_2] : memref<2x512xf32, #tpu.memory_space<vmem>>, vector<2x512xf32>
    %cst = arith.constant dense<0.000000e+00> : vector<256x2xf32>
    %2 = tpu.matmul %0, %1, %cst {dimension_numbers = #tpu.dot_dimension_numbers<[1], [1], [0], [0], [0, 0, 1, 0], [], []>} : vector<256x512xf32>, vector<2x512xf32>, vector<256x2xf32> -> vector<256x2xf32>
    %c0_3 = arith.constant 0 : index
    %c0_4 = arith.constant 0 : index
    %3 = vector.load %arg3[%c0_3, %c0_4] : memref<1x2xf32, #tpu.memory_space<vmem>>, vector<1x2xf32>
    %4 = vector.broadcast %3 : vector<1x2xf32> to vector<256x2xf32>
    %5 = arith.addf %2, %4 : vector<256x2xf32>
    %c0_5 = arith.constant 0 : index
    %c0_6 = arith.constant 0 : index
    %6 = vector.load %arg4[%c0_5, %c0_6] : memref<256x2xf32, #tpu.memory_space<vmem>>, vector<256x2xf32>
    tpu.vector_store %arg4[%c0_5, %c0_6], %5 {strides = array<i32>} : memref<256x2xf32, #tpu.memory_space<vmem>>, vector<256x2xf32>,
    return
  }
  func.func @transform_0(%arg0: i32) -> (i32, i32) {
    %c0_i32 = arith.constant 0 : i32
    %c0_i32_0 = arith.constant 0 : i32
    return %arg0, %c0_i32 : i32, i32
  }
  func.func @transform_1(%arg0: i32) -> (i32, i32) {
    %c0_i32 = arith.constant 0 : i32
    %c0_i32_0 = arith.constant 0 : i32
    %c0_i32_1 = arith.constant 0 : i32
    return %c0_i32, %c0_i32_0 : i32, i32
  }
  func.func @transform_2(%arg0: i32) -> (i32, i32) {
    %c0_i32 = arith.constant 0 : i32
    %c0_i32_0 = arith.constant 0 : i32
    %c0_i32_1 = arith.constant 0 : i32
    return %c0_i32, %c0_i32_0 : i32, i32
  }
  func.func @transform_3(%arg0: i32) -> (i32, i32) {
    %c0_i32 = arith.constant 0 : i32
    %c0_i32_0 = arith.constant 0 : i32
    return %arg0, %c0_i32 : i32, i32
  }
}

</mosaic_0001>

<llo_original>
// kernel: tpu_custom_call.1
$region0: #{tpu_custom_call.1}
  #allocation0 [shape = 'u32[]', space=smem, size = 0x4, offset = 0x4, fixed_abs, tag = 'smem constant byte address 0x4 - core index']
  #allocation1 [shape = 'u32[72,128]{1,0:T(1,128)}', space=vmem, size = 0x9000, scoped, tag = 'internal scratch']
  %s0 = inlined_call_operand.hbm [shape: f32[250,512], index: 0, kind: input, shape index: {}]
  %s1 = inlined_call_operand.hbm [shape: f32[2,512], index: 1, kind: input, shape index: {}]
  %s2 = inlined_call_operand.vmem [shape: f32[1,2], index: 2, kind: input, shape index: {}]
  %s3 = inlined_call_operand.vmem [shape: f32[250,2], index: 3, kind: output, shape index: {}]
  %s4 = sld [smem:[#allocation0]]
  $region30: #{tpu_custom_call.1} parent=0
    _
  %s6 = ssub.s32 1, %s4
  %s7 = scalar_select 0, %s6, %s4
  $region1: #{tpu_custom_call.1} parent=0
    #allocation2 [shape = 'u8[524288]{0}', space=vmem, size = 0x80000, scoped, tag = 'input window, operand 0, single buffered']
    #allocation3 [shape = 's32[1]{0}', space=sflag, size = 0x4, scoped, tag = 'scoped memory for tpu_custom_call.1']
    #allocation4 [shape = 'u8[4096]{0}', space=vmem, size = 0x1000, scoped, tag = 'input window, operand 1, single buffered']
    #allocation5 [shape = 's32[1]{0}', space=sflag, size = 0x4, scoped, tag = 'scoped memory for tpu_custom_call.1']
    %8 = vsyncpa [#allocation3], 0
    %9 = vsyncpa [#allocation5], 0
    // Predicated region
    $region2: #{tpu_custom_call.1} parent=1 // pred_check
      _
    $region3: #{tpu_custom_call.1} parent=1 // pred_check_branch
      %11 = sbr.rel (0) target = $region5
    $region4: #{tpu_custom_call.1} parent=1 // pred_region
      %13 = vsyncadd [#allocation3], 0
      %s14 = sshll.u32 %s0, 4
      %s15 = int_to_ptr.hbm [resolvable:$true] %s14
      %s16 = sshll.u32 [#allocation2], 4
      %s17 = int_to_ptr.vmem [resolvable:$true] %s16
      %22 = dma.hbm_to_vmem [thread:$0]  %s15, 16384, %s17, [#allocation3], 512, 512, 32
    $region5: #{tpu_custom_call.1} parent=1 // pred_fallthru
      _
    // Predicated region
    $region6: #{tpu_custom_call.1} parent=1 // pred_check
      _
    $region7: #{tpu_custom_call.1} parent=1 // pred_check_branch
      %24 = sbr.rel (0) target = $region9
    $region8: #{tpu_custom_call.1} parent=1 // pred_region
      %26 = vsyncadd [#allocation5], 0
      %s28 = sshll.u32 %s1, 4
      %s29 = int_to_ptr.hbm [resolvable:$true] %s28
      %s30 = sshll.u32 [#allocation4], 4
      %s31 = int_to_ptr.vmem [resolvable:$true] %s30
      %33 = dma.hbm_to_vmem [thread:$0]  %s29, 128, %s31, [#allocation5]
    $region9: #{tpu_custom_call.1} parent=1 // pred_fallthru
      _
    // Predicated region
    $region10: #{tpu_custom_call.1} parent=1 // pred_check
      _
    $region11: #{tpu_custom_call.1} parent=1 // pred_check_branch
      %35 = sbr.rel (0) target = $region13
    $region12: #{tpu_custom_call.1} parent=1 // pred_region
      _
    $region13: #{tpu_custom_call.1} parent=1 // pred_fallthru
      _
    // Predicated region
    $region14: #{tpu_custom_call.1} parent=1 // pred_check
      _
    $region15: #{tpu_custom_call.1} parent=1 // pred_check_branch
      %37 = sbr.rel (0) target = $region17
    $region16: #{tpu_custom_call.1} parent=1 // pred_region
      %39 = dma.done [#allocation3], 16384
    $region17: #{tpu_custom_call.1} parent=1 // pred_fallthru
      _
    // Predicated region
    $region18: #{tpu_custom_call.1} parent=1 // pred_check
      _
    $region19: #{tpu_custom_call.1} parent=1 // pred_check_branch
      %41 = sbr.rel (0) target = $region21
    $region20: #{tpu_custom_call.1} parent=1 // pred_region
      %43 = dma.done [#allocation5], 128
    $region21: #{tpu_custom_call.1} parent=1 // pred_fallthru
      _
    %v44 = vld [vmem:[#allocation2] sm:$0xff]
    %v45 = vld [vmem:[#allocation2 + $0x8] sm:$0xff]
    %v46 = vld [vmem:[#allocation2 + $0x10] sm:$0xff]
    %v47 = vld [vmem:[#allocation2 + $0x18] sm:$0xff]
    %v48 = vld [vmem:[#allocation2 + $0x20] sm:$0xff]
    %v49 = vld [vmem:[#allocation2 + $0x28] sm:$0xff]
    %v50 = vld [vmem:[#allocation2 + $0x30] sm:$0xff]
    %v51 = vld [vmem:[#allocation2 + $0x38] sm:$0xff]
    %v52 = vld [vmem:[#allocation2 + $0x40] sm:$0xff]
    %v53 = vld [vmem:[#allocation2 + $0x48] sm:$0xff]
    %v54 = vld [vmem:[#allocation2 + $0x50] sm:$0xff]
    %v55 = vld [vmem:[#allocation2 + $0x58] sm:$0xff]
    %v56 = vld [vmem:[#allocation2 + $0x60] sm:$0xff]
    %v57 = vld [vmem:[#allocation2 + $0x68] sm:$0xff]
    %v58 = vld [vmem:[#allocation2 + $0x70] sm:$0xff]
    %v59 = vld [vmem:[#allocation2 + $0x78] sm:$0xff]
    %v60 = vld [vmem:[#allocation2 + $0x80] sm:$0xff]
    %v61 = vld [vmem:[#allocation2 + $0x88] sm:$0xff]
    %v62 = vld [vmem:[#allocation2 + $0x90] sm:$0xff]
    %v63 = vld [vmem:[#allocation2 + $0x98] sm:$0xff]
    %v64 = vld [vmem:[#allocation2 + $0xa0] sm:$0xff]
    %v65 = vld [vmem:[#allocation2 + $0xa8] sm:$0xff]
    %v66 = vld [vmem:[#allocation2 + $0xb0] sm:$0xff]
    %v67 = vld [vmem:[#allocation2 + $0xb8] sm:$0xff]
    %v68 = vld [vmem:[#allocation2 + $0xc0] sm:$0xff]
    %v69 = vld [vmem:[#allocation2 + $0xc8] sm:$0xff]
    %v70 = vld [vmem:[#allocation2 + $0xd0] sm:$0xff]
    %v71 = vld [vmem:[#allocation2 + $0xd8] sm:$0xff]
    %v72 = vld [vmem:[#allocation2 + $0xe0] sm:$0xff]
    %v73 = vld [vmem:[#allocation2 + $0xe8] sm:$0xff]
    %v74 = vld [vmem:[#allocation2 + $0xf0] sm:$0xff]
    %v75 = vld [vmem:[#allocation2 + $0xf8] sm:$0xff]
    %v76 = vld [vmem:[#allocation2 + $0x100] sm:$0xff]
    %v77 = vld [vmem:[#allocation2 + $0x108] sm:$0xff]
    %v78 = vld [vmem:[#allocation2 + $0x110] sm:$0xff]
    %v79 = vld [vmem:[#allocation2 + $0x118] sm:$0xff]
    %v80 = vld [vmem:[#allocation2 + $0x120] sm:$0xff]
    %v81 = vld [vmem:[#allocation2 + $0x128] sm:$0xff]
    %v82 = vld [vmem:[#allocation2 + $0x130] sm:$0xff]
    %v83 = vld [vmem:[#allocation2 + $0x138] sm:$0xff]
    %v84 = vld [vmem:[#allocation2 + $0x140] sm:$0xff]
    %v85 = vld [vmem:[#allocation2 + $0x148] sm:$0xff]
    %v86 = vld [vmem:[#allocation2 + $0x150] sm:$0xff]
    %v87 = vld [vmem:[#allocation2 + $0x158] sm:$0xff]
    %v88 = vld [vmem:[#allocation2 + $0x160] sm:$0xff]
    %v89 = vld [vmem:[#allocation2 + $0x168] sm:$0xff]
    %v90 = vld [vmem:[#allocation2 + $0x170] sm:$0xff]
    %v91 = vld [vmem:[#allocation2 + $0x178] sm:$0xff]
    %v92 = vld [vmem:[#allocation2 + $0x180] sm:$0xff]
    %v93 = vld [vmem:[#allocation2 + $0x188] sm:$0xff]
    %v94 = vld [vmem:[#allocation2 + $0x190] sm:$0xff]
    %v95 = vld [vmem:[#allocation2 + $0x198] sm:$0xff]
    %v96 = vld [vmem:[#allocation2 + $0x1a0] sm:$0xff]
    %v97 = vld [vmem:[#allocation2 + $0x1a8] sm:$0xff]
    %v98 = vld [vmem:[#allocation2 + $0x1b0] sm:$0xff]
    %v99 = vld [vmem:[#allocation2 + $0x1b8] sm:$0xff]
    %v100 = vld [vmem:[#allocation2 + $0x1c0] sm:$0xff]
    %v101 = vld [vmem:[#allocation2 + $0x1c8] sm:$0xff]
    %v102 = vld [vmem:[#allocation2 + $0x1d0] sm:$0xff]
    %v103 = vld [vmem:[#allocation2 + $0x1d8] sm:$0xff]
    %v104 = vld [vmem:[#allocation2 + $0x1e0] sm:$0xff]
    %v105 = vld [vmem:[#allocation2 + $0x1e8] sm:$0xff]
    %v106 = vld [vmem:[#allocation2 + $0x1f0] sm:$0xff]
    %v107 = vld [vmem:[#allocation2 + $0x1f8] sm:$0xff]
    %v108 = vld [vmem:[#allocation2 + $0x200] sm:$0xff]
    %v109 = vld [vmem:[#allocation2 + $0x208] sm:$0xff]
    %v110 = vld [vmem:[#allocation2 + $0x210] sm:$0xff]
    %v111 = vld [vmem:[#allocation2 + $0x218] sm:$0xff]
    %v112 = vld [vmem:[#allocation2 + $0x220] sm:$0xff]
    %v113 = vld [vmem:[#allocation2 + $0x228] sm:$0xff]
    %v114 = vld [vmem:[#allocation2 + $0x230] sm:$0xff]
    %v115 = vld [vmem:[#allocation2 + $0x238] sm:$0xff]
    %v116 = vld [vmem:[#allocation2 + $0x240] sm:$0xff]
    %v117 = vld [vmem:[#allocation2 + $0x248] sm:$0xff]
    %v118 = vld [vmem:[#allocation2 + $0x250] sm:$0xff]
    %v119 = vld [vmem:[#allocation2 + $0x258] sm:$0xff]
    %v120 = vld [vmem:[#allocation2 + $0x260] sm:$0xff]
    %v121 = vld [vmem:[#allocation2 + $0x268] sm:$0xff]
    %v122 = vld [vmem:[#allocation2 + $0x270] sm:$0xff]
    %v123 = vld [vmem:[#allocation2 + $0x278] sm:$0xff]
    %v124 = vld [vmem:[#allocation2 + $0x280] sm:$0xff]
    %v125 = vld [vmem:[#allocation2 + $0x288] sm:$0xff]
    %v126 = vld [vmem:[#allocation2 + $0x290] sm:$0xff]
    %v127 = vld [vmem:[#allocation2 + $0x298] sm:$0xff]
    %v128 = vld [vmem:[#allocation2 + $0x2a0] sm:$0xff]
    %v129 = vld [vmem:[#allocation2 + $0x2a8] sm:$0xff]
    %v130 = vld [vmem:[#allocation2 + $0x2b0] sm:$0xff]
    %v131 = vld [vmem:[#allocation2 + $0x2b8] sm:$0xff]
    %v132 = vld [vmem:[#allocation2 + $0x2c0] sm:$0xff]
    %v133 = vld [vmem:[#allocation2 + $0x2c8] sm:$0xff]
    %v134 = vld [vmem:[#allocation2 + $0x2d0] sm:$0xff]
    %v135 = vld [vmem:[#allocation2 + $0x2d8] sm:$0xff]
    %v136 = vld [vmem:[#allocation2 + $0x2e0] sm:$0xff]
    %v137 = vld [vmem:[#allocation2 + $0x2e8] sm:$0xff]
    %v138 = vld [vmem:[#allocation2 + $0x2f0] sm:$0xff]
    %v139 = vld [vmem:[#allocation2 + $0x2f8] sm:$0xff]
    %v140 = vld [vmem:[#allocation2 + $0x300] sm:$0xff]
    %v141 = vld [vmem:[#allocation2 + $0x308] sm:$0xff]
    %v142 = vld [vmem:[#allocation2 + $0x310] sm:$0xff]
    %v143 = vld [vmem:[#allocation2 + $0x318] sm:$0xff]
    %v144 = vld [vmem:[#allocation2 + $0x320] sm:$0xff]
    %v145 = vld [vmem:[#allocation2 + $0x328] sm:$0xff]
    %v146 = vld [vmem:[#allocation2 + $0x330] sm:$0xff]
    %v147 = vld [vmem:[#allocation2 + $0x338] sm:$0xff]
    %v148 = vld [vmem:[#allocation2 + $0x340] sm:$0xff]
    %v149 = vld [vmem:[#allocation2 + $0x348] sm:$0xff]
    %v150 = vld [vmem:[#allocation2 + $0x350] sm:$0xff]
    %v151 = vld [vmem:[#allocation2 + $0x358] sm:$0xff]
    %v152 = vld [vmem:[#allocation2 + $0x360] sm:$0xff]
    %v153 = vld [vmem:[#allocation2 + $0x368] sm:$0xff]
    %v154 = vld [vmem:[#allocation2 + $0x370] sm:$0xff]
    %v155 = vld [vmem:[#allocation2 + $0x378] sm:$0xff]
    %v156 = vld [vmem:[#allocation2 + $0x380] sm:$0xff]
    %v157 = vld [vmem:[#allocation2 + $0x388] sm:$0xff]
    %v158 = vld [vmem:[#allocation2 + $0x390] sm:$0xff]
    %v159 = vld [vmem:[#allocation2 + $0x398] sm:$0xff]
    %v160 = vld [vmem:[#allocation2 + $0x3a0] sm:$0xff]
    %v161 = vld [vmem:[#allocation2 + $0x3a8] sm:$0xff]
    %v162 = vld [vmem:[#allocation2 + $0x3b0] sm:$0xff]
    %v163 = vld [vmem:[#allocation2 + $0x3b8] sm:$0xff]
    %v164 = vld [vmem:[#allocation2 + $0x3c0] sm:$0xff]
    %v165 = vld [vmem:[#allocation2 + $0x3c8] sm:$0xff]
    %v166 = vld [vmem:[#allocation2 + $0x3d0] sm:$0xff]
    %v167 = vld [vmem:[#allocation2 + $0x3d8] sm:$0xff]
    %v168 = vld [vmem:[#allocation2 + $0x3e0] sm:$0xff]
    %v169 = vld [vmem:[#allocation2 + $0x3e8] sm:$0xff]
    %v170 = vld [vmem:[#allocation2 + $0x3f0] sm:$0xff]
    %v171 = vld [vmem:[#allocation2 + $0x3f8] sm:$0xff]
    %v172 = vld [vmem:[#allocation4] sm:$0xff]
    %v173 = vld [vmem:[%s2] sm:$0x1]
    %v175 = vperm.slane %v173, 0
    %178 = vst [vmem:[#allocation1] ss:$4 sm:$0xff] %v172
    %v179 = vld.sshfl [vmem:[#allocation1] sm:$0xff pattern:$0x73625140]
    %v180 = vld.sshfl [vmem:[#allocation1 + $0x8] sm:$0xff pattern:$0x73625140]
    %v181 = vld.sshfl [vmem:[#allocation1 + $0x10] sm:$0xff pattern:$0x73625140]
    %v182 = vld.sshfl [vmem:[#allocation1 + $0x18] sm:$0xff pattern:$0x73625140]
    %187 = vmatpush.xpose.msra.mxu0 0.0
    %188 = vmatpush.xpose.msra.mxu0 0.0
    %189 = vmatpush.xpose.msra.mxu0 0.0
    %190 = vmatpush.xpose.msra.mxu0 0.0
    %191 = vmatpush.xpose.msra.mxu0 0.0
    %192 = vmatpush.xpose.msra.mxu0 0.0
    %193 = vmatpush.xpose.msra.mxu0 0.0
    %194 = vmatpush.xpose.msra.mxu0 0.0
    %195 = vmatpush.xpose.msra.mxu0 0.0
    %196 = vmatpush.xpose.msra.mxu0 0.0
    %197 = vmatpush.xpose.msra.mxu0 0.0
    %198 = vmatpush.xpose.msra.mxu0 0.0
    %199 = vmatpush.xpose.msra.mxu0 0.0
    %200 = vmatpush.xpose.msra.mxu0 0.0
    %201 = vmatpush.xpose.msra.mxu0 0.0
    %202 = vmatpush.xpose.msra.mxu0 %v179
    %203 = vmatmul.f32.gmra.mxu0 %v44
    %v204 = vpop.f32.mrf.mxu0
    %v205 = vadd.f32 %v175, %v204
    %206 = vmatmul.f32.gmra.mxu0 %v48
    %v207 = vpop.f32.mrf.mxu0
    %v208 = vadd.f32 %v175, %v207
    %209 = vmatmul.f32.gmra.mxu0 %v52
    %v210 = vpop.f32.mrf.mxu0
    %v211 = vadd.f32 %v175, %v210
    %212 = vmatmul.f32.gmra.mxu0 %v56
    %v213 = vpop.f32.mrf.mxu0
    %v214 = vadd.f32 %v175, %v213
    %215 = vmatmul.f32.gmra.mxu0 %v60
    %v216 = vpop.f32.mrf.mxu0
    %v217 = vadd.f32 %v175, %v216
    %218 = vmatmul.f32.gmra.mxu0 %v64
    %v219 = vpop.f32.mrf.mxu0
    %v220 = vadd.f32 %v175, %v219
    %221 = vmatmul.f32.gmra.mxu0 %v68
    %v222 = vpop.f32.mrf.mxu0
    %v223 = vadd.f32 %v175, %v222
    %224 = vmatmul.f32.gmra.mxu0 %v72
    %v225 = vpop.f32.mrf.mxu0
    %v226 = vadd.f32 %v175, %v225
    %227 = vmatmul.f32.gmra.mxu0 %v76
    %v228 = vpop.f32.mrf.mxu0
    %v229 = vadd.f32 %v175, %v228
    %230 = vmatmul.f32.gmra.mxu0 %v80
    %v231 = vpop.f32.mrf.mxu0
    %v232 = vadd.f32 %v175, %v231
    %233 = vmatmul.f32.gmra.mxu0 %v84
    %v234 = vpop.f32.mrf.mxu0
    %v235 = vadd.f32 %v175, %v234
    %236 = vmatmul.f32.gmra.mxu0 %v88
    %v237 = vpop.f32.mrf.mxu0
    %v238 = vadd.f32 %v175, %v237
    %239 = vmatmul.f32.gmra.mxu0 %v92
    %v240 = vpop.f32.mrf.mxu0
    %v241 = vadd.f32 %v175, %v240
    %242 = vmatmul.f32.gmra.mxu0 %v96
    %v243 = vpop.f32.mrf.mxu0
    %v244 = vadd.f32 %v175, %v243
    %245 = vmatmul.f32.gmra.mxu0 %v100
    %v246 = vpop.f32.mrf.mxu0
    %v247 = vadd.f32 %v175, %v246
    %248 = vmatmul.f32.gmra.mxu0 %v104
    %v249 = vpop.f32.mrf.mxu0
    %v250 = vadd.f32 %v175, %v249
    %251 = vmatmul.f32.gmra.mxu0 %v108
    %v252 = vpop.f32.mrf.mxu0
    %v253 = vadd.f32 %v175, %v252
    %254 = vmatmul.f32.gmra.mxu0 %v112
    %v255 = vpop.f32.mrf.mxu0
    %v256 = vadd.f32 %v175, %v255
    %257 = vmatmul.f32.gmra.mxu0 %v116
    %v258 = vpop.f32.mrf.mxu0
    %v259 = vadd.f32 %v175, %v258
    %260 = vmatmul.f32.gmra.mxu0 %v120
    %v261 = vpop.f32.mrf.mxu0
    %v262 = vadd.f32 %v175, %v261
    %263 = vmatmul.f32.gmra.mxu0 %v124
    %v264 = vpop.f32.mrf.mxu0
    %v265 = vadd.f32 %v175, %v264
    %266 = vmatmul.f32.gmra.mxu0 %v128
    %v267 = vpop.f32.mrf.mxu0
    %v268 = vadd.f32 %v175, %v267
    %269 = vmatmul.f32.gmra.mxu0 %v132
    %v270 = vpop.f32.mrf.mxu0
    %v271 = vadd.f32 %v175, %v270
    %272 = vmatmul.f32.gmra.mxu0 %v136
    %v273 = vpop.f32.mrf.mxu0
    %v274 = vadd.f32 %v175, %v273
    %275 = vmatmul.f32.gmra.mxu0 %v140
    %v276 = vpop.f32.mrf.mxu0
    %v277 = vadd.f32 %v175, %v276
    %278 = vmatmul.f32.gmra.mxu0 %v144
    %v279 = vpop.f32.mrf.mxu0
    %v280 = vadd.f32 %v175, %v279
    %281 = vmatmul.f32.gmra.mxu0 %v148
    %v282 = vpop.f32.mrf.mxu0
    %v283 = vadd.f32 %v175, %v282
    %284 = vmatmul.f32.gmra.mxu0 %v152
    %v285 = vpop.f32.mrf.mxu0
    %v286 = vadd.f32 %v175, %v285
    %287 = vmatmul.f32.gmra.mxu0 %v156
    %v288 = vpop.f32.mrf.mxu0
    %v289 = vadd.f32 %v175, %v288
    %290 = vmatmul.f32.gmra.mxu0 %v160
    %v291 = vpop.f32.mrf.mxu0
    %v292 = vadd.f32 %v175, %v291
    %293 = vmatmul.f32.gmra.mxu0 %v164
    %v294 = vpop.f32.mrf.mxu0
    %v295 = vadd.f32 %v175, %v294
    %296 = vmatmul.f32.gmra.mxu0 %v168
    %v297 = vpop.f32.mrf.mxu0
    %v298 = vadd.f32 %v175, %v297
    %299 = vdwg.mxu0
    %300 = vmatpush.xpose.msra.mxu0 0.0
    %301 = vmatpush.xpose.msra.mxu0 0.0
    %302 = vmatpush.xpose.msra.mxu0 0.0
    %303 = vmatpush.xpose.msra.mxu0 0.0
    %304 = vmatpush.xpose.msra.mxu0 0.0
    %305 = vmatpush.xpose.msra.mxu0 0.0
    %306 = vmatpush.xpose.msra.mxu0 0.0
    %307 = vmatpush.xpose.msra.mxu0 0.0
    %308 = vmatpush.xpose.msra.mxu0 0.0
    %309 = vmatpush.xpose.msra.mxu0 0.0
    %310 = vmatpush.xpose.msra.mxu0 0.0
    %311 = vmatpush.xpose.msra.mxu0 0.0
    %312 = vmatpush.xpose.msra.mxu0 0.0
    %313 = vmatpush.xpose.msra.mxu0 0.0
    %314 = vmatpush.xpose.msra.mxu0 0.0
    %315 = vmatpush.xpose.msra.mxu0 %v180
    %316 = vmatmul.f32.gmra.mxu0 %v45
    %v317 = vpop.f32.mrf.mxu0
    %v318 = vadd.f32 %v205, %v317
    %319 = vmatmul.f32.gmra.mxu0 %v49
    %v320 = vpop.f32.mrf.mxu0
    %v321 = vadd.f32 %v208, %v320
    %322 = vmatmul.f32.gmra.mxu0 %v53
    %v323 = vpop.f32.mrf.mxu0
    %v324 = vadd.f32 %v211, %v323
    %325 = vmatmul.f32.gmra.mxu0 %v57
    %v326 = vpop.f32.mrf.mxu0
    %v327 = vadd.f32 %v214, %v326
    %328 = vmatmul.f32.gmra.mxu0 %v61
    %v329 = vpop.f32.mrf.mxu0
    %v330 = vadd.f32 %v217, %v329
    %331 = vmatmul.f32.gmra.mxu0 %v65
    %v332 = vpop.f32.mrf.mxu0
    %v333 = vadd.f32 %v220, %v332
    %334 = vmatmul.f32.gmra.mxu0 %v69
    %v335 = vpop.f32.mrf.mxu0
    %v336 = vadd.f32 %v223, %v335
    %337 = vmatmul.f32.gmra.mxu0 %v73
    %v338 = vpop.f32.mrf.mxu0
    %v339 = vadd.f32 %v226, %v338
    %340 = vmatmul.f32.gmra.mxu0 %v77
    %v341 = vpop.f32.mrf.mxu0
    %v342 = vadd.f32 %v229, %v341
    %343 = vmatmul.f32.gmra.mxu0 %v81
    %v344 = vpop.f32.mrf.mxu0
    %v345 = vadd.f32 %v232, %v344
    %346 = vmatmul.f32.gmra.mxu0 %v85
    %v347 = vpop.f32.mrf.mxu0
    %v348 = vadd.f32 %v235, %v347
    %349 = vmatmul.f32.gmra.mxu0 %v89
    %v350 = vpop.f32.mrf.mxu0
    %v351 = vadd.f32 %v238, %v350
    %352 = vmatmul.f32.gmra.mxu0 %v93
    %v353 = vpop.f32.mrf.mxu0
    %v354 = vadd.f32 %v241, %v353
    %355 = vmatmul.f32.gmra.mxu0 %v97
    %v356 = vpop.f32.mrf.mxu0
    %v357 = vadd.f32 %v244, %v356
    %358 = vmatmul.f32.gmra.mxu0 %v101
    %v359 = vpop.f32.mrf.mxu0
    %v360 = vadd.f32 %v247, %v359
    %361 = vmatmul.f32.gmra.mxu0 %v105
    %v362 = vpop.f32.mrf.mxu0
    %v363 = vadd.f32 %v250, %v362
    %364 = vmatmul.f32.gmra.mxu0 %v109
    %v365 = vpop.f32.mrf.mxu0
    %v366 = vadd.f32 %v253, %v365
    %367 = vmatmul.f32.gmra.mxu0 %v113
    %v368 = vpop.f32.mrf.mxu0
    %v369 = vadd.f32 %v256, %v368
    %370 = vmatmul.f32.gmra.mxu0 %v117
    %v371 = vpop.f32.mrf.mxu0
    %v372 = vadd.f32 %v259, %v371
    %373 = vmatmul.f32.gmra.mxu0 %v121
    %v374 = vpop.f32.mrf.mxu0
    %v375 = vadd.f32 %v262, %v374
    %376 = vmatmul.f32.gmra.mxu0 %v125
    %v377 = vpop.f32.mrf.mxu0
    %v378 = vadd.f32 %v265, %v377
    %379 = vmatmul.f32.gmra.mxu0 %v129
    %v380 = vpop.f32.mrf.mxu0
    %v381 = vadd.f32 %v268, %v380
    %382 = vmatmul.f32.gmra.mxu0 %v133
    %v383 = vpop.f32.mrf.mxu0
    %v384 = vadd.f32 %v271, %v383
    %385 = vmatmul.f32.gmra.mxu0 %v137
    %v386 = vpop.f32.mrf.mxu0
    %v387 = vadd.f32 %v274, %v386
    %388 = vmatmul.f32.gmra.mxu0 %v141
    %v389 = vpop.f32.mrf.mxu0
    %v390 = vadd.f32 %v277, %v389
    %391 = vmatmul.f32.gmra.mxu0 %v145
    %v392 = vpop.f32.mrf.mxu0
    %v393 = vadd.f32 %v280, %v392
    %394 = vmatmul.f32.gmra.mxu0 %v149
    %v395 = vpop.f32.mrf.mxu0
    %v396 = vadd.f32 %v283, %v395
    %397 = vmatmul.f32.gmra.mxu0 %v153
    %v398 = vpop.f32.mrf.mxu0
    %v399 = vadd.f32 %v286, %v398
    %400 = vmatmul.f32.gmra.mxu0 %v157
    %v401 = vpop.f32.mrf.mxu0
    %v402 = vadd.f32 %v289, %v401
    %403 = vmatmul.f32.gmra.mxu0 %v161
    %v404 = vpop.f32.mrf.mxu0
    %v405 = vadd.f32 %v292, %v404
    %406 = vmatmul.f32.gmra.mxu0 %v165
    %v407 = vpop.f32.mrf.mxu0
    %v408 = vadd.f32 %v295, %v407
    %409 = vmatmul.f32.gmra.mxu0 %v169
    %v410 = vpop.f32.mrf.mxu0
    %v411 = vadd.f32 %v298, %v410
    %412 = vdwg.mxu0
    %413 = vmatpush.xpose.msra.mxu0 0.0
    %414 = vmatpush.xpose.msra.mxu0 0.0
    %415 = vmatpush.xpose.msra.mxu0 0.0
    %416 = vmatpush.xpose.msra.mxu0 0.0
    %417 = vmatpush.xpose.msra.mxu0 0.0
    %418 = vmatpush.xpose.msra.mxu0 0.0
    %419 = vmatpush.xpose.msra.mxu0 0.0
    %420 = vmatpush.xpose.msra.mxu0 0.0
    %421 = vmatpush.xpose.msra.mxu0 0.0
    %422 = vmatpush.xpose.msra.mxu0 0.0
    %423 = vmatpush.xpose.msra.mxu0 0.0
    %424 = vmatpush.xpose.msra.mxu0 0.0
    %425 = vmatpush.xpose.msra.mxu0 0.0
    %426 = vmatpush.xpose.msra.mxu0 0.0
    %427 = vmatpush.xpose.msra.mxu0 0.0
    %428 = vmatpush.xpose.msra.mxu0 %v181
    %429 = vmatmul.f32.gmra.mxu0 %v46
    %v430 = vpop.f32.mrf.mxu0
    %v431 = vadd.f32 %v318, %v430
    %432 = vmatmul.f32.gmra.mxu0 %v50
    %v433 = vpop.f32.mrf.mxu0
    %v434 = vadd.f32 %v321, %v433
    %435 = vmatmul.f32.gmra.mxu0 %v54
    %v436 = vpop.f32.mrf.mxu0
    %v437 = vadd.f32 %v324, %v436
    %438 = vmatmul.f32.gmra.mxu0 %v58
    %v439 = vpop.f32.mrf.mxu0
    %v440 = vadd.f32 %v327, %v439
    %441 = vmatmul.f32.gmra.mxu0 %v62
    %v442 = vpop.f32.mrf.mxu0
    %v443 = vadd.f32 %v330, %v442
    %444 = vmatmul.f32.gmra.mxu0 %v66
    %v445 = vpop.f32.mrf.mxu0
    %v446 = vadd.f32 %v333, %v445
    %447 = vmatmul.f32.gmra.mxu0 %v70
    %v448 = vpop.f32.mrf.mxu0
    %v449 = vadd.f32 %v336, %v448
    %450 = vmatmul.f32.gmra.mxu0 %v74
    %v451 = vpop.f32.mrf.mxu0
    %v452 = vadd.f32 %v339, %v451
    %453 = vmatmul.f32.gmra.mxu0 %v78
    %v454 = vpop.f32.mrf.mxu0
    %v455 = vadd.f32 %v342, %v454
    %456 = vmatmul.f32.gmra.mxu0 %v82
    %v457 = vpop.f32.mrf.mxu0
    %v458 = vadd.f32 %v345, %v457
    %459 = vmatmul.f32.gmra.mxu0 %v86
    %v460 = vpop.f32.mrf.mxu0
    %v461 = vadd.f32 %v348, %v460
    %462 = vmatmul.f32.gmra.mxu0 %v90
    %v463 = vpop.f32.mrf.mxu0
    %v464 = vadd.f32 %v351, %v463
    %465 = vmatmul.f32.gmra.mxu0 %v94
    %v466 = vpop.f32.mrf.mxu0
    %v467 = vadd.f32 %v354, %v466
    %468 = vmatmul.f32.gmra.mxu0 %v98
    %v469 = vpop.f32.mrf.mxu0
    %v470 = vadd.f32 %v357, %v469
    %471 = vmatmul.f32.gmra.mxu0 %v102
    %v472 = vpop.f32.mrf.mxu0
    %v473 = vadd.f32 %v360, %v472
    %474 = vmatmul.f32.gmra.mxu0 %v106
    %v475 = vpop.f32.mrf.mxu0
    %v476 = vadd.f32 %v363, %v475
    %477 = vmatmul.f32.gmra.mxu0 %v110
    %v478 = vpop.f32.mrf.mxu0
    %v479 = vadd.f32 %v366, %v478
    %480 = vmatmul.f32.gmra.mxu0 %v114
    %v481 = vpop.f32.mrf.mxu0
    %v482 = vadd.f32 %v369, %v481
    %483 = vmatmul.f32.gmra.mxu0 %v118
    %v484 = vpop.f32.mrf.mxu0
    %v485 = vadd.f32 %v372, %v484
    %486 = vmatmul.f32.gmra.mxu0 %v122
    %v487 = vpop.f32.mrf.mxu0
    %v488 = vadd.f32 %v375, %v487
    %489 = vmatmul.f32.gmra.mxu0 %v126
    %v490 = vpop.f32.mrf.mxu0
    %v491 = vadd.f32 %v378, %v490
    %492 = vmatmul.f32.gmra.mxu0 %v130
    %v493 = vpop.f32.mrf.mxu0
    %v494 = vadd.f32 %v381, %v493
    %495 = vmatmul.f32.gmra.mxu0 %v134
    %v496 = vpop.f32.mrf.mxu0
    %v497 = vadd.f32 %v384, %v496
    %498 = vmatmul.f32.gmra.mxu0 %v138
    %v499 = vpop.f32.mrf.mxu0
    %v500 = vadd.f32 %v387, %v499
    %501 = vmatmul.f32.gmra.mxu0 %v142
    %v502 = vpop.f32.mrf.mxu0
    %v503 = vadd.f32 %v390, %v502
    %504 = vmatmul.f32.gmra.mxu0 %v146
    %v505 = vpop.f32.mrf.mxu0
    %v506 = vadd.f32 %v393, %v505
    %507 = vmatmul.f32.gmra.mxu0 %v150
    %v508 = vpop.f32.mrf.mxu0
    %v509 = vadd.f32 %v396, %v508
    %510 = vmatmul.f32.gmra.mxu0 %v154
    %v511 = vpop.f32.mrf.mxu0
    %v512 = vadd.f32 %v399, %v511
    %513 = vmatmul.f32.gmra.mxu0 %v158
    %v514 = vpop.f32.mrf.mxu0
    %v515 = vadd.f32 %v402, %v514
    %516 = vmatmul.f32.gmra.mxu0 %v162
    %v517 = vpop.f32.mrf.mxu0
    %v518 = vadd.f32 %v405, %v517
    %519 = vmatmul.f32.gmra.mxu0 %v166
    %v520 = vpop.f32.mrf.mxu0
    %v521 = vadd.f32 %v408, %v520
    %522 = vmatmul.f32.gmra.mxu0 %v170
    %v523 = vpop.f32.mrf.mxu0
    %v524 = vadd.f32 %v411, %v523
    %525 = vdwg.mxu0
    %526 = vmatpush.xpose.msra.mxu0 0.0
    %527 = vmatpush.xpose.msra.mxu0 0.0
    %528 = vmatpush.xpose.msra.mxu0 0.0
    %529 = vmatpush.xpose.msra.mxu0 0.0
    %530 = vmatpush.xpose.msra.mxu0 0.0
    %531 = vmatpush.xpose.msra.mxu0 0.0
    %532 = vmatpush.xpose.msra.mxu0 0.0
    %533 = vmatpush.xpose.msra.mxu0 0.0
    %534 = vmatpush.xpose.msra.mxu0 0.0
    %535 = vmatpush.xpose.msra.mxu0 0.0
    %536 = vmatpush.xpose.msra.mxu0 0.0
    %537 = vmatpush.xpose.msra.mxu0 0.0
    %538 = vmatpush.xpose.msra.mxu0 0.0
    %539 = vmatpush.xpose.msra.mxu0 0.0
    %540 = vmatpush.xpose.msra.mxu0 0.0
    %541 = vmatpush.xpose.msra.mxu0 %v182
    %542 = vmatmul.f32.gmra.mxu0 %v47
    %v543 = vpop.f32.mrf.mxu0
    %v544 = vadd.f32 %v431, %v543
    %545 = vmatmul.f32.gmra.mxu0 %v51
    %v546 = vpop.f32.mrf.mxu0
    %v547 = vadd.f32 %v434, %v546
    %548 = vmatmul.f32.gmra.mxu0 %v55
    %v549 = vpop.f32.mrf.mxu0
    %v550 = vadd.f32 %v437, %v549
    %551 = vmatmul.f32.gmra.mxu0 %v59
    %v552 = vpop.f32.mrf.mxu0
    %v553 = vadd.f32 %v440, %v552
    %554 = vmatmul.f32.gmra.mxu0 %v63
    %v555 = vpop.f32.mrf.mxu0
    %v556 = vadd.f32 %v443, %v555
    %557 = vmatmul.f32.gmra.mxu0 %v67
    %v558 = vpop.f32.mrf.mxu0
    %v559 = vadd.f32 %v446, %v558
    %560 = vmatmul.f32.gmra.mxu0 %v71
    %v561 = vpop.f32.mrf.mxu0
    %v562 = vadd.f32 %v449, %v561
    %563 = vmatmul.f32.gmra.mxu0 %v75
    %v564 = vpop.f32.mrf.mxu0
    %v565 = vadd.f32 %v452, %v564
    %566 = vmatmul.f32.gmra.mxu0 %v79
    %v567 = vpop.f32.mrf.mxu0
    %v568 = vadd.f32 %v455, %v567
    %569 = vmatmul.f32.gmra.mxu0 %v83
    %v570 = vpop.f32.mrf.mxu0
    %v571 = vadd.f32 %v458, %v570
    %572 = vmatmul.f32.gmra.mxu0 %v87
    %v573 = vpop.f32.mrf.mxu0
    %v574 = vadd.f32 %v461, %v573
    %575 = vmatmul.f32.gmra.mxu0 %v91
    %v576 = vpop.f32.mrf.mxu0
    %v577 = vadd.f32 %v464, %v576
    %578 = vmatmul.f32.gmra.mxu0 %v95
    %v579 = vpop.f32.mrf.mxu0
    %v580 = vadd.f32 %v467, %v579
    %581 = vmatmul.f32.gmra.mxu0 %v99
    %v582 = vpop.f32.mrf.mxu0
    %v583 = vadd.f32 %v470, %v582
    %584 = vmatmul.f32.gmra.mxu0 %v103
    %v585 = vpop.f32.mrf.mxu0
    %v586 = vadd.f32 %v473, %v585
    %587 = vmatmul.f32.gmra.mxu0 %v107
    %v588 = vpop.f32.mrf.mxu0
    %v589 = vadd.f32 %v476, %v588
    %590 = vmatmul.f32.gmra.mxu0 %v111
    %v591 = vpop.f32.mrf.mxu0
    %v592 = vadd.f32 %v479, %v591
    %593 = vmatmul.f32.gmra.mxu0 %v115
    %v594 = vpop.f32.mrf.mxu0
    %v595 = vadd.f32 %v482, %v594
    %596 = vmatmul.f32.gmra.mxu0 %v119
    %v597 = vpop.f32.mrf.mxu0
    %v598 = vadd.f32 %v485, %v597
    %599 = vmatmul.f32.gmra.mxu0 %v123
    %v600 = vpop.f32.mrf.mxu0
    %v601 = vadd.f32 %v488, %v600
    %602 = vmatmul.f32.gmra.mxu0 %v127
    %v603 = vpop.f32.mrf.mxu0
    %v604 = vadd.f32 %v491, %v603
    %605 = vmatmul.f32.gmra.mxu0 %v131
    %v606 = vpop.f32.mrf.mxu0
    %v607 = vadd.f32 %v494, %v606
    %608 = vmatmul.f32.gmra.mxu0 %v135
    %v609 = vpop.f32.mrf.mxu0
    %v610 = vadd.f32 %v497, %v609
    %611 = vmatmul.f32.gmra.mxu0 %v139
    %v612 = vpop.f32.mrf.mxu0
    %v613 = vadd.f32 %v500, %v612
    %614 = vmatmul.f32.gmra.mxu0 %v143
    %v615 = vpop.f32.mrf.mxu0
    %v616 = vadd.f32 %v503, %v615
    %617 = vmatmul.f32.gmra.mxu0 %v147
    %v618 = vpop.f32.mrf.mxu0
    %v619 = vadd.f32 %v506, %v618
    %620 = vmatmul.f32.gmra.mxu0 %v151
    %v621 = vpop.f32.mrf.mxu0
    %v622 = vadd.f32 %v509, %v621
    %623 = vmatmul.f32.gmra.mxu0 %v155
    %v624 = vpop.f32.mrf.mxu0
    %v625 = vadd.f32 %v512, %v624
    %626 = vmatmul.f32.gmra.mxu0 %v159
    %v627 = vpop.f32.mrf.mxu0
    %v628 = vadd.f32 %v515, %v627
    %629 = vmatmul.f32.gmra.mxu0 %v163
    %v630 = vpop.f32.mrf.mxu0
    %v631 = vadd.f32 %v518, %v630
    %632 = vmatmul.f32.gmra.mxu0 %v167
    %v633 = vpop.f32.mrf.mxu0
    %v634 = vadd.f32 %v521, %v633
    %635 = vmatmul.f32.gmra.mxu0 %v171
    %v636 = vpop.f32.mrf.mxu0
    %v637 = vadd.f32 %v524, %v636
    %638 = vdwg.mxu0
    %vm639 = vcmask 15360
    %640 = vst.msk [vmem:[%s3] sm:$0xff] %vm639, %v544
    %641 = vst.msk [vmem:[%s3 + $0x8] sm:$0xff] %vm639, %v547
    %642 = vst.msk [vmem:[%s3 + $0x10] sm:$0xff] %vm639, %v550
    %643 = vst.msk [vmem:[%s3 + $0x18] sm:$0xff] %vm639, %v553
    %644 = vst.msk [vmem:[%s3 + $0x20] sm:$0xff] %vm639, %v556
    %645 = vst.msk [vmem:[%s3 + $0x28] sm:$0xff] %vm639, %v559
    %646 = vst.msk [vmem:[%s3 + $0x30] sm:$0xff] %vm639, %v562
    %647 = vst.msk [vmem:[%s3 + $0x38] sm:$0xff] %vm639, %v565
    %648 = vst.msk [vmem:[%s3 + $0x40] sm:$0xff] %vm639, %v568
    %649 = vst.msk [vmem:[%s3 + $0x48] sm:$0xff] %vm639, %v571
    %650 = vst.msk [vmem:[%s3 + $0x50] sm:$0xff] %vm639, %v574
    %651 = vst.msk [vmem:[%s3 + $0x58] sm:$0xff] %vm639, %v577
    %652 = vst.msk [vmem:[%s3 + $0x60] sm:$0xff] %vm639, %v580
    %653 = vst.msk [vmem:[%s3 + $0x68] sm:$0xff] %vm639, %v583
    %654 = vst.msk [vmem:[%s3 + $0x70] sm:$0xff] %vm639, %v586
    %655 = vst.msk [vmem:[%s3 + $0x78] sm:$0xff] %vm639, %v589
    %656 = vst.msk [vmem:[%s3 + $0x80] sm:$0xff] %vm639, %v592
    %657 = vst.msk [vmem:[%s3 + $0x88] sm:$0xff] %vm639, %v595
    %658 = vst.msk [vmem:[%s3 + $0x90] sm:$0xff] %vm639, %v598
    %659 = vst.msk [vmem:[%s3 + $0x98] sm:$0xff] %vm639, %v601
    %660 = vst.msk [vmem:[%s3 + $0xa0] sm:$0xff] %vm639, %v604
    %661 = vst.msk [vmem:[%s3 + $0xa8] sm:$0xff] %vm639, %v607
    %662 = vst.msk [vmem:[%s3 + $0xb0] sm:$0xff] %vm639, %v610
    %663 = vst.msk [vmem:[%s3 + $0xb8] sm:$0xff] %vm639, %v613
    %664 = vst.msk [vmem:[%s3 + $0xc0] sm:$0xff] %vm639, %v616
    %665 = vst.msk [vmem:[%s3 + $0xc8] sm:$0xff] %vm639, %v619
    %666 = vst.msk [vmem:[%s3 + $0xd0] sm:$0xff] %vm639, %v622
    %667 = vst.msk [vmem:[%s3 + $0xd8] sm:$0xff] %vm639, %v625
    %668 = vst.msk [vmem:[%s3 + $0xe0] sm:$0xff] %vm639, %v628
    %669 = vst.msk [vmem:[%s3 + $0xe8] sm:$0xff] %vm639, %v631
    %670 = vst.msk [vmem:[%s3 + $0xf0] sm:$0xff] %vm639, %v634
    %671 = vst.msk [vmem:[%s3 + $0xf8] sm:$0xff] %vm639, %v637
    // Predicated region
    $region22: #{tpu_custom_call.1} parent=1 // pred_check
      _
    $region23: #{tpu_custom_call.1} parent=1 // pred_check_branch
      %673 = sbr.rel (0) target = $region25
    $region24: #{tpu_custom_call.1} parent=1 // pred_region
      _
    $region25: #{tpu_custom_call.1} parent=1 // pred_fallthru
      _
    // Predicated region
    $region26: #{tpu_custom_call.1} parent=1 // pred_check
      _
    $region27: #{tpu_custom_call.1} parent=1 // pred_check_branch
      %675 = sbr.rel (0) target = $region29
    $region28: #{tpu_custom_call.1} parent=1 // pred_region
      _
    $region29: #{tpu_custom_call.1} parent=1 // pred_fallthru
      _
    %676 = vsyncpa [#allocation3], 1
    %677 = vsyncpa [#allocation5], 1

</llo_original>
